<compile_context>
chip_gen: v7x
topology: tpu7x:2x2x1
jax: 0.10.0
libtpu: 0.0.40
codegen_flags: <defaults>
</compile_context>

<pallas_src>
import functools

import jax
import jax.numpy as jnp
from jax.experimental import pallas as pl
from jax.experimental.pallas import tpu as pltpu

HIDDEN = 512
LN_EPS = 1e-5
_INV_SQRT2 = 0.7071067811865476
_SQRT_2_OVER_PI = 0.7978845608028654
_SPLIT_MIN = 256   # min rows per grid step before splitting a 1-step grid in two


def _round_up(x, m):
    return ((x + m - 1) // m) * m


def _erf_poly(x):
    # Abramowitz & Stegun 7.1.26 (max abs err ~1.5e-7).  Uses only exp /
    # select / mul so it lowers inside Pallas on every TPU generation.
    a1, a2, a3, a4, a5 = (0.254829592, -0.284496736, 1.421413741,
                          -1.453152027, 1.061405429)
    p = 0.3275911
    s = jnp.where(x >= 0.0, 1.0, -1.0)
    z = jnp.abs(x)
    t = 1.0 / (1.0 + p * z)
    poly = t * (a1 + t * (a2 + t * (a3 + t * (a4 + t * a5))))
    return s * (1.0 - poly * jnp.exp(-z * z))


def _multitask_head_kernel(x_ref, w1_ref, b1_ref, w2_ref, b2_ref, o_ref, *,
                           num_classes, approximate_gelu):
    # ---- LayerNorm (affine gamma/beta already folded into W1/b1) ----
    x = x_ref[...].astype(jnp.float32)
    mu = jnp.mean(x, axis=-1, keepdims=True)
    xc = x - mu
    var = jnp.mean(xc * xc, axis=-1, keepdims=True)       # two-pass variance
    xn = xc * jax.lax.rsqrt(var + LN_EPS)

    # ---- Dropout(p=0.5): identity in eval mode ----

    # ---- Linear(D -> 512): MXU matmul, f32 accumulation ----
    h = jnp.dot(xn.astype(w1_ref.dtype), w1_ref[...],
                preferred_element_type=jnp.float32) + b1_ref[...]

    # ---- GELU ----
    if approximate_gelu:
        # tanh form: the transcendental runs on the EUP slot (frees the VALU);
        # max deviation from erf-GELU ~3e-3.
        h = 0.5 * h * (1.0 + jnp.tanh(_SQRT_2_OVER_PI * (h + 0.044715 * h * h * h)))
    else:
        # exact (erf) formulation -- torch.nn.GELU default, parity mode
        h = 0.5 * h * (1.0 + _erf_poly(h * _INV_SQRT2))

    # ---- Dropout(p=0.3): identity in eval mode ----

    # ---- Linear(512 -> C): lane-dense (C padded to 128) matmul in VMEM,
    #      but only the first num_classes lanes are stored to HBM ----
    out = jnp.dot(h.astype(w2_ref.dtype), w2_ref[...],
                  preferred_element_type=jnp.float32) + b2_ref[...]
    o_ref[...] = out[:, :num_classes].astype(o_ref.dtype)


def prepare_params(gamma, beta, w1, b1, w2, b2, *, weights_dtype=jnp.bfloat16):
    """One-time eval-mode parameter prep (hoisted out of the per-call path)."""
    D = w1.shape[0]
    C = w2.shape[1]
    # Fold LN affine into the first Linear:
    #   (xn*gamma + beta) @ W1 + b1 == xn @ (gamma[:,None]*W1) + (beta @ W1 + b1)
    gamma_f = gamma.reshape(D).astype(jnp.float32)
    beta_f = beta.reshape(D).astype(jnp.float32)
    w1_f32 = w1.astype(jnp.float32)
    w1f = (gamma_f[:, None] * w1_f32).astype(weights_dtype)
    b1f = b1.reshape(1, HIDDEN).astype(jnp.float32) + beta_f[None, :] @ w1_f32
    # Lane-dense class dimension for the second matmul; the padding lives only
    # in the weights / VMEM -- the kernel's HBM output stays (B, C).
    C_pad = _round_up(C, 128)
    w2p = jnp.pad(w2.astype(jnp.float32), ((0, 0), (0, C_pad - C))).astype(weights_dtype)
    b2p = jnp.pad(b2.reshape(1, C).astype(jnp.float32), ((0, 0), (0, C_pad - C)))
    return w1f, b1f, w2p, b2p


def _vmem_capacity_bytes():
    try:
        return int(pltpu.get_tpu_info().vmem_capacity_bytes)
    except Exception:
        return 64 << 20          # conservative default (v7x per-TC capacity)


def _estimate_vmem(bb, D, C, C_pad, w_itemsize):
    weights = (2 * (D * HIDDEN + HIDDEN * C_pad) * w_itemsize   # double-buffered
               + 2 * (HIDDEN + C_pad) * 4)                      # biases
    return (2 * bb * D * 4                        # x tile (double-buffered, f32)
            + 2 * bb * C * 4                      # (bb, C) out tile (double-buffered)
            + weights
            + bb * (D + 2 * HIDDEN + C_pad) * 4)  # f32 temporaries


def _pick_block_b(D, C, C_pad, w_itemsize, budget):
    for bb in (1024, 512, 256, 128, 64, 32, 16, 8):
        if _estimate_vmem(bb, D, C, C_pad, w_itemsize) <= budget:
            return bb
    return 8


@functools.partial(jax.jit, static_argnames=("num_classes", "approximate_gelu"))
def multitask_head_fused(x, w1f, b1f, w2p, b2p, *, num_classes,
                         approximate_gelu=True):
    """Fused eval-mode head on prepared params.  x: (B, D) -> (B, num_classes)."""
    B, D = x.shape
    C = num_classes
    C_pad = w2p.shape[1]
    w_itemsize = jnp.dtype(w1f.dtype).itemsize

    # ---- device-aware batch tiling: kernel is HBM-bound, so use the biggest
    #      row tile that fits ~half of this device's VMEM ----
    vmem_cap = _vmem_capacity_bytes()
    bb_cap = _pick_block_b(D, C, C_pad, w_itemsize, vmem_cap // 2)
    if B <= bb_cap:
        if B > 2 * _SPLIT_MIN:
            # whole batch fits one tile, but both v7x TCs can get >= 256 rows
            bb = _round_up(pl.cdiv(B, 2), 8)
            n_steps = 2
        else:
            bb = B           # single step, block == full batch dim, no padding
            n_steps = 1
    else:
        bb = bb_cap
        n_steps = pl.cdiv(B, bb)   # ragged last tile is masked by Pallas

    est = _estimate_vmem(bb, D, C, C_pad, w_itemsize)
    vmem_limit = int(min(max(2 * est, 32 << 20), (3 * vmem_cap) // 4))

    kernel = functools.partial(_multitask_head_kernel,
                               num_classes=C, approximate_gelu=approximate_gelu)

    return pl.pallas_call(
        kernel,
        out_shape=jax.ShapeDtypeStruct((B, C), x.dtype),
        grid_spec=pltpu.PrefetchScalarGridSpec(
            num_scalar_prefetch=0,
            grid=(n_steps,),
            in_specs=[
                pl.BlockSpec((bb, D), lambda i: (i, 0)),          # x tile
                pl.BlockSpec((D, HIDDEN), lambda i: (0, 0)),      # folded W1
                pl.BlockSpec((1, HIDDEN), lambda i: (0, 0)),      # folded b1
                pl.BlockSpec((HIDDEN, C_pad), lambda i: (0, 0)),  # padded W2
                pl.BlockSpec((1, C_pad), lambda i: (0, 0)),       # padded b2
            ],
            out_specs=pl.BlockSpec((bb, C), lambda i: (i, 0)),    # unpadded (B, C)
        ),
        compiler_params=pltpu.CompilerParams(
            dimension_semantics=("parallel",),
            vmem_limit_bytes=vmem_limit),
    )(x, w1f, b1f, w2p, b2p)


def multitask_head(x, gamma, beta, w1, b1, w2, b2, *, weights_dtype=jnp.bfloat16,
                   approximate_gelu=True):
    """One-shot convenience wrapper.  For repeated inference, call
    prepare_params() once and reuse with multitask_head_fused()."""
    params = prepare_params(gamma, beta, w1, b1, w2, b2, weights_dtype=weights_dtype)
    return multitask_head_fused(x, *params, num_classes=w2.shape[1],
                                approximate_gelu=approximate_gelu)


def reference_head(x, gamma, beta, w1, b1, w2, b2):
    """Pure-JAX reference of the PyTorch forward (eval mode, exact erf GELU)."""
    x = x.astype(jnp.float32)
    mu = jnp.mean(x, axis=-1, keepdims=True)
    var = jnp.mean((x - mu) ** 2, axis=-1, keepdims=True)
    xn = (x - mu) * jax.lax.rsqrt(var + LN_EPS)
    xn = xn * gamma.reshape(1, -1) + beta.reshape(1, -1)
    h = xn @ w1 + b1.reshape(1, -1)
    h = 0.5 * h * (1.0 + jax.lax.erf(h * _INV_SQRT2))
    return h @ w2 + b2.reshape(1, -1)


if __name__ == "__main__":
    key = jax.random.PRNGKey(0)
    D = 256          # in_features
    C = 10           # num_classes (e.g. CholecT50 verb classes)

    kg, kb, kw1, kb1, kw2, kb2, kx, kx2 = jax.random.split(key, 8)
    # Non-trivial LayerNorm affine so the gamma/beta -> W1/b1 folding is exercised.
    gamma = 1.0 + 0.1 * jax.random.normal(kg, (D,), jnp.float32)
    beta = 0.05 * jax.random.normal(kb, (D,), jnp.float32)
    w1 = jax.random.normal(kw1, (D, HIDDEN), jnp.float32) * (1.0 / jnp.sqrt(D))
    b1 = 0.01 * jax.random.normal(kb1, (HIDDEN,), jnp.float32)
    w2 = jax.random.normal(kw2, (HIDDEN, C), jnp.float32) * (1.0 / jnp.sqrt(HIDDEN))
    b2 = 0.01 * jax.random.normal(kb2, (C,), jnp.float32)

    # One-time eval-mode parameter prep (review item: hoist out of per-call path).
    params_fast = prepare_params(gamma, beta, w1, b1, w2, b2,
                                 weights_dtype=jnp.bfloat16)
    params_parity = prepare_params(gamma, beta, w1, b1, w2, b2,
                                   weights_dtype=jnp.float32)

    # ---- small batch: single grid step, block == full batch, no padding ----
    B = 32
    x = jax.random.normal(kx, (B, D), dtype=jnp.float32)
    ref = reference_head(x, gamma, beta, w1, b1, w2, b2)

    out_par = jax.block_until_ready(
        multitask_head_fused(x, *params_parity, num_classes=C,
                             approximate_gelu=False))
    assert out_par.shape == (B, C)
    # Tolerance covers possible bf16-pass decomposition of f32 dots on the MXU.
    assert jnp.allclose(out_par, ref, atol=5e-2, rtol=5e-2), (
        f"f32/erf max abs err {float(jnp.max(jnp.abs(out_par - ref)))}")

    out_fast = jax.block_until_ready(
        multitask_head_fused(x, *params_fast, num_classes=C))
    assert out_fast.shape == (B, C)
    # Relaxed tolerance: bf16 MXU operands + tanh-approx GELU fast path.
    assert jnp.allclose(out_fast, ref, atol=1e-1, rtol=1e-1), (
        f"bf16/tanh max abs err {float(jnp.max(jnp.abs(out_fast - ref)))}")

    # ---- ragged batch: exercises the 2-step grid and the masked last tile
    #      (no wrapper-side padding of x, no wrapper-side output slice) ----
    B2 = 600
    x2 = jax.random.normal(kx2, (B2, D), dtype=jnp.float32)
    ref2 = reference_head(x2, gamma, beta, w1, b1, w2, b2)
    out2 = jax.block_until_ready(
        multitask_head_fused(x2, *params_fast, num_classes=C))
    assert out2.shape == (B2, C)
    assert jnp.allclose(out2, ref2, atol=1e-1, rtol=1e-1), (
        f"ragged max abs err {float(jnp.max(jnp.abs(out2 - ref2)))}")

    print("KERNEL_OK")
</pallas_src>

<mosaic_0001>
module attributes {stable_mosaic.version = 11 : i64} {
  func.func @_multitask_head_kernel(%arg0: i32, %arg1: memref<32x256xf32, #tpu.memory_space<vmem>>, %arg2: memref<256x512xf32, #tpu.memory_space<vmem>>, %arg3: memref<1x512xf32, #tpu.memory_space<vmem>>, %arg4: memref<512x128xf32, #tpu.memory_space<vmem>>, %arg5: memref<1x128xf32, #tpu.memory_space<vmem>>, %arg6: memref<32x10xf32, #tpu.memory_space<vmem>>) attributes {dimension_semantics = [#tpu.dimension_semantics<parallel>], iteration_bounds = array<i64: 1>, scalar_prefetch = 0 : i64, scratch_operands = 0 : i64, tpu.core_type = #tpu.core_type<tc>, window_params = [{transform_indices = @transform_0, window_bounds = array<i64: 32, 256>}, {pipeline_mode = #tpu.pipeline_mode<synchronous>, transform_indices = @transform_1, window_bounds = array<i64: 256, 512>}, {pipeline_mode = #tpu.pipeline_mode<synchronous>, transform_indices = @transform_2, window_bounds = array<i64: 1, 512>}, {pipeline_mode = #tpu.pipeline_mode<synchronous>, transform_indices = @transform_3, window_bounds = array<i64: 512, 128>}, {pipeline_mode = #tpu.pipeline_mode<synchronous>, transform_indices = @transform_4, window_bounds = array<i64: 1, 128>}, {transform_indices = @transform_5, window_bounds = array<i64: 32, 10>}]} {
    %c0 = arith.constant 0 : index
    %c0_0 = arith.constant 0 : index
    %0 = vector.load %arg1[%c0, %c0_0] : memref<32x256xf32, #tpu.memory_space<vmem>>, vector<32x256xf32>
    %cst = arith.constant dense<0.000000e+00> : vector<32xf32>
    %1 = vector.multi_reduction <add>, %0, %cst [1] : vector<32x256xf32> to vector<32xf32>
    %2 = vector.shape_cast %1 : vector<32xf32> to vector<32x1xf32>
    %cst_1 = arith.constant 2.560000e+02 : f32
    %3 = vector.broadcast %cst_1 : f32 to vector<32x1xf32>
    %4 = arith.divf %2, %3 : vector<32x1xf32>
    %5 = vector.broadcast %4 : vector<32x1xf32> to vector<32x256xf32>
    %6 = arith.subf %0, %5 : vector<32x256xf32>
    %7 = arith.mulf %6, %6 : vector<32x256xf32>
    %cst_2 = arith.constant dense<0.000000e+00> : vector<32xf32>
    %8 = vector.multi_reduction <add>, %7, %cst_2 [1] : vector<32x256xf32> to vector<32xf32>
    %9 = vector.shape_cast %8 : vector<32xf32> to vector<32x1xf32>
    %cst_3 = arith.constant 2.560000e+02 : f32
    %10 = vector.broadcast %cst_3 : f32 to vector<32x1xf32>
    %11 = arith.divf %9, %10 : vector<32x1xf32>
    %cst_4 = arith.constant 9.99999974E-6 : f32
    %12 = vector.broadcast %cst_4 : f32 to vector<32x1xf32>
    %13 = arith.addf %11, %12 : vector<32x1xf32>
    %14 = math.rsqrt %13 : vector<32x1xf32>
    %15 = vector.broadcast %14 : vector<32x1xf32> to vector<32x256xf32>
    %16 = arith.mulf %6, %15 : vector<32x256xf32>
    %c0_5 = arith.constant 0 : index
    %c0_6 = arith.constant 0 : index
    %17 = vector.load %arg2[%c0_5, %c0_6] : memref<256x512xf32, #tpu.memory_space<vmem>>, vector<256x512xf32>
    %cst_7 = arith.constant dense<0.000000e+00> : vector<32x512xf32>
    %18 = tpu.matmul %16, %17, %cst_7 {dimension_numbers = #tpu.dot_dimension_numbers<[1], [0], [0], [1], [0, 0, 1, 1], [], []>} : vector<32x256xf32>, vector<256x512xf32>, vector<32x512xf32> -> vector<32x512xf32>
    %c0_8 = arith.constant 0 : index
    %c0_9 = arith.constant 0 : index
    %19 = vector.load %arg3[%c0_8, %c0_9] : memref<1x512xf32, #tpu.memory_space<vmem>>, vector<1x512xf32>
    %20 = vector.broadcast %19 : vector<1x512xf32> to vector<32x512xf32>
    %21 = arith.addf %18, %20 : vector<32x512xf32>
    %cst_10 = arith.constant 5.000000e-01 : f32
    %22 = vector.broadcast %cst_10 : f32 to vector<32x512xf32>
    %23 = arith.mulf %22, %21 : vector<32x512xf32>
    %cst_11 = arith.constant 0.707106769 : f32
    %24 = vector.broadcast %cst_11 : f32 to vector<32x512xf32>
    %25 = arith.mulf %21, %24 : vector<32x512xf32>
    %cst_12 = arith.constant 0.000000e+00 : f32
    %26 = vector.broadcast %cst_12 : f32 to vector<32x512xf32>
    %27 = arith.cmpf oge, %25, %26 : vector<32x512xf32>
    %cst_13 = arith.constant 1.000000e+00 : f32
    %cst_14 = arith.constant -1.000000e+00 : f32
    %28 = vector.broadcast %cst_13 : f32 to vector<32x512xf32>
    %29 = vector.broadcast %cst_14 : f32 to vector<32x512xf32>
    %30 = arith.select %27, %28, %29 : vector<32x512xi1>, vector<32x512xf32>
    %31 = math.absf %25 : vector<32x512xf32>
    %cst_15 = arith.constant 0.327591091 : f32
    %32 = vector.broadcast %cst_15 : f32 to vector<32x512xf32>
    %33 = arith.mulf %32, %31 : vector<32x512xf32>
    %cst_16 = arith.constant 1.000000e+00 : f32
    %34 = vector.broadcast %cst_16 : f32 to vector<32x512xf32>
    %35 = arith.addf %34, %33 : vector<32x512xf32>
    %cst_17 = arith.constant 1.000000e+00 : f32
    %36 = vector.broadcast %cst_17 : f32 to vector<32x512xf32>
    %37 = arith.divf %36, %35 : vector<32x512xf32>
    %cst_18 = arith.constant 1.06140542 : f32
    %38 = vector.broadcast %cst_18 : f32 to vector<32x512xf32>
    %39 = arith.mulf %37, %38 : vector<32x512xf32>
    %cst_19 = arith.constant -1.45315206 : f32
    %40 = vector.broadcast %cst_19 : f32 to vector<32x512xf32>
    %41 = arith.addf %40, %39 : vector<32x512xf32>
    %42 = arith.mulf %37, %41 : vector<32x512xf32>
    %cst_20 = arith.constant 1.42141378 : f32
    %43 = vector.broadcast %cst_20 : f32 to vector<32x512xf32>
    %44 = arith.addf %43, %42 : vector<32x512xf32>
    %45 = arith.mulf %37, %44 : vector<32x512xf32>
    %cst_21 = arith.constant -0.284496725 : f32
    %46 = vector.broadcast %cst_21 : f32 to vector<32x512xf32>
    %47 = arith.addf %46, %45 : vector<32x512xf32>
    %48 = arith.mulf %37, %47 : vector<32x512xf32>
    %cst_22 = arith.constant 0.254829586 : f32
    %49 = vector.broadcast %cst_22 : f32 to vector<32x512xf32>
    %50 = arith.addf %49, %48 : vector<32x512xf32>
    %51 = arith.mulf %37, %50 : vector<32x512xf32>
    %cst_23 = arith.constant 0.000000e+00 : f32
    %52 = vector.broadcast %cst_23 : f32 to vector<32x512xf32>
    %53 = arith.subf %52, %31 : vector<32x512xf32>
    %54 = arith.mulf %53, %31 : vector<32x512xf32>
    %55 = math.exp %54 : vector<32x512xf32>
    %56 = arith.mulf %51, %55 : vector<32x512xf32>
    %cst_24 = arith.constant 1.000000e+00 : f32
    %57 = vector.broadcast %cst_24 : f32 to vector<32x512xf32>
    %58 = arith.subf %57, %56 : vector<32x512xf32>
    %59 = arith.mulf %30, %58 : vector<32x512xf32>
    %cst_25 = arith.constant 1.000000e+00 : f32
    %60 = vector.broadcast %cst_25 : f32 to vector<32x512xf32>
    %61 = arith.addf %60, %59 : vector<32x512xf32>
    %62 = arith.mulf %23, %61 : vector<32x512xf32>
    %c0_26 = arith.constant 0 : index
    %c0_27 = arith.constant 0 : index
    %63 = vector.load %arg4[%c0_26, %c0_27] : memref<512x128xf32, #tpu.memory_space<vmem>>, vector<512x128xf32>
    %cst_28 = arith.constant dense<0.000000e+00> : vector<32x128xf32>
    %64 = tpu.matmul %62, %63, %cst_28 {dimension_numbers = #tpu.dot_dimension_numbers<[1], [0], [0], [1], [0, 0, 1, 1], [], []>} : vector<32x512xf32>, vector<512x128xf32>, vector<32x128xf32> -> vector<32x128xf32>
    %c0_29 = arith.constant 0 : index
    %c0_30 = arith.constant 0 : index
    %65 = vector.load %arg5[%c0_29, %c0_30] : memref<1x128xf32, #tpu.memory_space<vmem>>, vector<1x128xf32>
    %66 = vector.broadcast %65 : vector<1x128xf32> to vector<32x128xf32>
    %67 = arith.addf %64, %66 : vector<32x128xf32>
    %68 = vector.extract_strided_slice %67 {offsets = [0, 0], sizes = [32, 10], strides = [1, 1]} : vector<32x128xf32> to vector<32x10xf32>
    %c0_31 = arith.constant 0 : index
    %c0_32 = arith.constant 0 : index
    %69 = vector.load %arg6[%c0_31, %c0_32] : memref<32x10xf32, #tpu.memory_space<vmem>>, vector<32x10xf32>
    tpu.vector_store %arg6[%c0_31, %c0_32], %68 {strides = array<i32>} : memref<32x10xf32, #tpu.memory_space<vmem>>, vector<32x10xf32>,
    return
  }
  func.func @transform_0(%arg0: i32) -> (i32, i32) {
    %c0_i32 = arith.constant 0 : i32
    %c0_i32_0 = arith.constant 0 : i32
    return %arg0, %c0_i32 : i32, i32
  }
  func.func @transform_1(%arg0: i32) -> (i32, i32) {
    %c0_i32 = arith.constant 0 : i32
    %c0_i32_0 = arith.constant 0 : i32
    %c0_i32_1 = arith.constant 0 : i32
    return %c0_i32, %c0_i32_0 : i32, i32
  }
  func.func @transform_2(%arg0: i32) -> (i32, i32) {
    %c0_i32 = arith.constant 0 : i32
    %c0_i32_0 = arith.constant 0 : i32
    %c0_i32_1 = arith.constant 0 : i32
    return %c0_i32, %c0_i32_0 : i32, i32
  }
  func.func @transform_3(%arg0: i32) -> (i32, i32) {
    %c0_i32 = arith.constant 0 : i32
    %c0_i32_0 = arith.constant 0 : i32
    %c0_i32_1 = arith.constant 0 : i32
    return %c0_i32, %c0_i32_0 : i32, i32
  }
  func.func @transform_4(%arg0: i32) -> (i32, i32) {
    %c0_i32 = arith.constant 0 : i32
    %c0_i32_0 = arith.constant 0 : i32
    %c0_i32_1 = arith.constant 0 : i32
    return %c0_i32, %c0_i32_0 : i32, i32
  }
  func.func @transform_5(%arg0: i32) -> (i32, i32) {
    %c0_i32 = arith.constant 0 : i32
    %c0_i32_0 = arith.constant 0 : i32
    return %arg0, %c0_i32 : i32, i32
  }
}

</mosaic_0001>

<llo_original>
// kernel: multitask_head_fused.1
$region0: #{multitask_head_fused.1}
  #allocation0 [shape = 'u32[]', space=smem, size = 0x4, offset = 0x4, fixed_abs, tag = 'smem constant byte address 0x4 - core index']
  #allocation1 [shape = 'u32[144,128]{1,0:T(1,128)}', space=vmem, size = 0x12000, scoped, tag = 'internal scratch']
  %s0 = inlined_call_operand.hbm [shape: f32[32,256], index: 0, kind: input, shape index: {}]
  %s1 = inlined_call_operand.hbm [shape: f32[256,512], index: 1, kind: input, shape index: {}]
  %s2 = inlined_call_operand.vmem [shape: f32[1,512], index: 2, kind: input, shape index: {}]
  %s3 = inlined_call_operand.hbm [shape: f32[512,128], index: 3, kind: input, shape index: {}]
  %s4 = inlined_call_operand.vmem [shape: f32[1,128], index: 4, kind: input, shape index: {}]
  %s5 = inlined_call_operand.vmem [shape: f32[32,10], index: 5, kind: output, shape index: {}]
  %s6 = sld [smem:[#allocation0]]
  $region42: #{multitask_head_fused.1} parent=0
    _
  %s8 = ssub.s32 1, %s6
  %s9 = scalar_select 0, %s8, %s6
  $region1: #{multitask_head_fused.1} parent=0
    #allocation2 [shape = 'u8[32768]{0}', space=vmem, size = 0x8000, scoped, tag = 'input window, operand 0, single buffered']
    #allocation3 [shape = 's32[1]{0}', space=sflag, size = 0x4, scoped, tag = 'scoped memory for multitask_head_fused.1']
    #allocation4 [shape = 'u8[524288]{0}', space=vmem, size = 0x80000, scoped, tag = 'input window, operand 1, single buffered']
    #allocation5 [shape = 's32[1]{0}', space=sflag, size = 0x4, scoped, tag = 'scoped memory for multitask_head_fused.1']
    #allocation6 [shape = 'u8[262144]{0}', space=vmem, size = 0x40000, scoped, tag = 'input window, operand 3, single buffered']
    %10 = vsyncpa [#allocation3], 0
    %11 = vsyncpa [#allocation5], 0
    // Predicated region
    $region2: #{multitask_head_fused.1} parent=1 // pred_check
      _
    $region3: #{multitask_head_fused.1} parent=1 // pred_check_branch
      %13 = sbr.rel (0) target = $region5
    $region4: #{multitask_head_fused.1} parent=1 // pred_region
      %s15 = ssub.s32 1024, 1024
      %16 = vsyncadd [#allocation3], %s15
      %s17 = sshll.u32 [#allocation2], 4
      %s18 = int_to_ptr.vmem [resolvable:$true] %s17
      %23 = dma.hbm_to_vmem [thread:$0]  %s0, 1024, %s18, [#allocation3], 256, 256, 16
    $region5: #{multitask_head_fused.1} parent=1 // pred_fallthru
      _
    // Predicated region
    $region6: #{multitask_head_fused.1} parent=1 // pred_check
      _
    $region7: #{multitask_head_fused.1} parent=1 // pred_check_branch
      %25 = sbr.rel (0) target = $region9
    $region8: #{multitask_head_fused.1} parent=1 // pred_region
      %s27 = ssub.s32 16384, 16384
      %28 = vsyncadd [#allocation5], %s27
      %s29 = sshll.u32 [#allocation4], 4
      %s30 = int_to_ptr.vmem [resolvable:$true] %s29
      %35 = dma.hbm_to_vmem [thread:$0]  %s1, 16384, %s30, [#allocation5], 512, 512, 32
    $region9: #{multitask_head_fused.1} parent=1 // pred_fallthru
      _
    // Predicated region
    $region10: #{multitask_head_fused.1} parent=1 // pred_check
      _
    $region11: #{multitask_head_fused.1} parent=1 // pred_check_branch
      %37 = sbr.rel (0) target = $region13
    $region12: #{multitask_head_fused.1} parent=1 // pred_region
      _
    $region13: #{multitask_head_fused.1} parent=1 // pred_fallthru
      _
    // Predicated region
    $region14: #{multitask_head_fused.1} parent=1 // pred_check
      _
    $region15: #{multitask_head_fused.1} parent=1 // pred_check_branch
      %39 = sbr.rel (0) target = $region17
    $region16: #{multitask_head_fused.1} parent=1 // pred_region
      %s41 = ssub.s32 8192, 8192
      %42 = vsyncadd [#allocation5], %s41
      %s43 = sshll.u32 [#allocation6], 4
      %s44 = int_to_ptr.vmem [resolvable:$true] %s43
      %49 = dma.hbm_to_vmem [thread:$0]  %s3, 8192, %s44, [#allocation5], 128, 128, 8
    $region17: #{multitask_head_fused.1} parent=1 // pred_fallthru
      _
    // Predicated region
    $region18: #{multitask_head_fused.1} parent=1 // pred_check
      _
    $region19: #{multitask_head_fused.1} parent=1 // pred_check_branch
      %51 = sbr.rel (0) target = $region21
    $region20: #{multitask_head_fused.1} parent=1 // pred_region
      _
    $region21: #{multitask_head_fused.1} parent=1 // pred_fallthru
      _
    // Predicated region
    $region22: #{multitask_head_fused.1} parent=1 // pred_check
      _
    $region23: #{multitask_head_fused.1} parent=1 // pred_check_branch
      %53 = sbr.rel (0) target = $region25
    $region24: #{multitask_head_fused.1} parent=1 // pred_region
      %54 = dma.done [#allocation3], 1024
    $region25: #{multitask_head_fused.1} parent=1 // pred_fallthru
      _
    // Predicated region
    $region26: #{multitask_head_fused.1} parent=1 // pred_check
      _
    $region27: #{multitask_head_fused.1} parent=1 // pred_check_branch
      %56 = sbr.rel (0) target = $region29
    $region28: #{multitask_head_fused.1} parent=1 // pred_region
      %57 = dma.done [#allocation5], 16384
    $region29: #{multitask_head_fused.1} parent=1 // pred_fallthru
      _
    // Predicated region
    $region30: #{multitask_head_fused.1} parent=1 // pred_check
      _
    $region31: #{multitask_head_fused.1} parent=1 // pred_check_branch
      %59 = sbr.rel (0) target = $region33
    $region32: #{multitask_head_fused.1} parent=1 // pred_region
      %60 = dma.done [#allocation5], 8192
    $region33: #{multitask_head_fused.1} parent=1 // pred_fallthru
      _
    %v61 = vld [vmem:[#allocation2] sm:$0xff]
    %v62 = vld [vmem:[#allocation2 + $0x8] sm:$0xff]
    %v63 = vld [vmem:[#allocation2 + $0x10] sm:$0xff]
    %v64 = vld [vmem:[#allocation2 + $0x18] sm:$0xff]
    %v65 = vld [vmem:[#allocation2 + $0x20] sm:$0xff]
    %v66 = vld [vmem:[#allocation2 + $0x28] sm:$0xff]
    %v67 = vld [vmem:[#allocation2 + $0x30] sm:$0xff]
    %v68 = vld [vmem:[#allocation2 + $0x38] sm:$0xff]
    %v69 = vadd.f32 %v61, %v62
    %70 = vadd.xlane.f32.xlu0 %v69
    %v71 = vpop.xlane.xlu0 %70
    %v72 = vadd.f32 %v63, %v64
    %73 = vadd.xlane.f32.xlu0 %v72
    %v74 = vpop.xlane.xlu0 %73
    %v75 = vadd.f32 %v65, %v66
    %76 = vadd.xlane.f32.xlu0 %v75
    %v77 = vpop.xlane.xlu0 %76
    %v78 = vadd.f32 %v67, %v68
    %79 = vadd.xlane.f32.xlu0 %v78
    %v80 = vpop.xlane.xlu0 %79
    %v81 = vrcp.pop 256.0
    %v82 = vmul.f32 %v71, %v81
    %v83 = vmul.f32 %v74, %v81
    %v84 = vmul.f32 %v77, %v81
    %v85 = vmul.f32 %v80, %v81
    %v86 = vsub.f32 %v61, %v82
    %v87 = vsub.f32 %v62, %v82
    %v88 = vsub.f32 %v63, %v83
    %v89 = vsub.f32 %v64, %v83
    %v90 = vsub.f32 %v65, %v84
    %v91 = vsub.f32 %v66, %v84
    %v92 = vsub.f32 %v67, %v85
    %v93 = vsub.f32 %v68, %v85
    %v94 = vmul.f32 %v86, %v86
    %v95 = vmul.f32 %v87, %v87
    %v96 = vmul.f32 %v88, %v88
    %v97 = vmul.f32 %v89, %v89
    %v98 = vmul.f32 %v90, %v90
    %v99 = vmul.f32 %v91, %v91
    %v100 = vmul.f32 %v92, %v92
    %v101 = vmul.f32 %v93, %v93
    %v102 = vadd.f32 %v94, %v95
    %103 = vadd.xlane.f32.xlu0 %v102
    %v104 = vpop.xlane.xlu0 %103
    %v105 = vadd.f32 %v96, %v97
    %106 = vadd.xlane.f32.xlu0 %v105
    %v107 = vpop.xlane.xlu0 %106
    %v108 = vadd.f32 %v98, %v99
    %109 = vadd.xlane.f32.xlu0 %v108
    %v110 = vpop.xlane.xlu0 %109
    %v111 = vadd.f32 %v100, %v101
    %112 = vadd.xlane.f32.xlu0 %v111
    %v113 = vpop.xlane.xlu0 %112
    %v114 = vmul.f32 %v104, %v81
    %v115 = vmul.f32 %v107, %v81
    %v116 = vmul.f32 %v110, %v81
    %v117 = vmul.f32 %v113, %v81
    %v118 = vadd.f32 %v114, 1e-05
    %v119 = vadd.f32 %v115, 1e-05
    %v120 = vadd.f32 %v116, 1e-05
    %v121 = vadd.f32 %v117, 1e-05
    %v122 = vrsqrt.pop %v118
    %v123 = vrsqrt.pop %v119
    %v124 = vrsqrt.pop %v120
    %v125 = vrsqrt.pop %v121
    %v126 = vmul.f32 %v86, %v122
    %v127 = vmul.f32 %v87, %v122
    %v128 = vmul.f32 %v88, %v123
    %v129 = vmul.f32 %v89, %v123
    %v130 = vmul.f32 %v90, %v124
    %v131 = vmul.f32 %v91, %v124
    %v132 = vmul.f32 %v92, %v125
    %v133 = vmul.f32 %v93, %v125
    %v134 = vld [vmem:[#allocation4] sm:$0xff]
    %v135 = vld [vmem:[#allocation4 + $0x8] sm:$0xff]
    %v136 = vld [vmem:[#allocation4 + $0x10] sm:$0xff]
    %v137 = vld [vmem:[#allocation4 + $0x18] sm:$0xff]
    %v138 = vld [vmem:[#allocation4 + $0x20] sm:$0xff]
    %v139 = vld [vmem:[#allocation4 + $0x28] sm:$0xff]
    %v140 = vld [vmem:[#allocation4 + $0x30] sm:$0xff]
    %v141 = vld [vmem:[#allocation4 + $0x38] sm:$0xff]
    %v142 = vld [vmem:[#allocation4 + $0x40] sm:$0xff]
    %v143 = vld [vmem:[#allocation4 + $0x48] sm:$0xff]
    %v144 = vld [vmem:[#allocation4 + $0x50] sm:$0xff]
    %v145 = vld [vmem:[#allocation4 + $0x58] sm:$0xff]
    %v146 = vld [vmem:[#allocation4 + $0x60] sm:$0xff]
    %v147 = vld [vmem:[#allocation4 + $0x68] sm:$0xff]
    %v148 = vld [vmem:[#allocation4 + $0x70] sm:$0xff]
    %v149 = vld [vmem:[#allocation4 + $0x78] sm:$0xff]
    %v150 = vld [vmem:[#allocation4 + $0x80] sm:$0xff]
    %v151 = vld [vmem:[#allocation4 + $0x88] sm:$0xff]
    %v152 = vld [vmem:[#allocation4 + $0x90] sm:$0xff]
    %v153 = vld [vmem:[#allocation4 + $0x98] sm:$0xff]
    %v154 = vld [vmem:[#allocation4 + $0xa0] sm:$0xff]
    %v155 = vld [vmem:[#allocation4 + $0xa8] sm:$0xff]
    %v156 = vld [vmem:[#allocation4 + $0xb0] sm:$0xff]
    %v157 = vld [vmem:[#allocation4 + $0xb8] sm:$0xff]
    %v158 = vld [vmem:[#allocation4 + $0xc0] sm:$0xff]
    %v159 = vld [vmem:[#allocation4 + $0xc8] sm:$0xff]
    %v160 = vld [vmem:[#allocation4 + $0xd0] sm:$0xff]
    %v161 = vld [vmem:[#allocation4 + $0xd8] sm:$0xff]
    %v162 = vld [vmem:[#allocation4 + $0xe0] sm:$0xff]
    %v163 = vld [vmem:[#allocation4 + $0xe8] sm:$0xff]
    %v164 = vld [vmem:[#allocation4 + $0xf0] sm:$0xff]
    %v165 = vld [vmem:[#allocation4 + $0xf8] sm:$0xff]
    %v166 = vld [vmem:[#allocation4 + $0x100] sm:$0xff]
    %v167 = vld [vmem:[#allocation4 + $0x108] sm:$0xff]
    %v168 = vld [vmem:[#allocation4 + $0x110] sm:$0xff]
    %v169 = vld [vmem:[#allocation4 + $0x118] sm:$0xff]
    %v170 = vld [vmem:[#allocation4 + $0x120] sm:$0xff]
    %v171 = vld [vmem:[#allocation4 + $0x128] sm:$0xff]
    %v172 = vld [vmem:[#allocation4 + $0x130] sm:$0xff]
    %v173 = vld [vmem:[#allocation4 + $0x138] sm:$0xff]
    %v174 = vld [vmem:[#allocation4 + $0x140] sm:$0xff]
    %v175 = vld [vmem:[#allocation4 + $0x148] sm:$0xff]
    %v176 = vld [vmem:[#allocation4 + $0x150] sm:$0xff]
    %v177 = vld [vmem:[#allocation4 + $0x158] sm:$0xff]
    %v178 = vld [vmem:[#allocation4 + $0x160] sm:$0xff]
    %v179 = vld [vmem:[#allocation4 + $0x168] sm:$0xff]
    %v180 = vld [vmem:[#allocation4 + $0x170] sm:$0xff]
    %v181 = vld [vmem:[#allocation4 + $0x178] sm:$0xff]
    %v182 = vld [vmem:[#allocation4 + $0x180] sm:$0xff]
    %v183 = vld [vmem:[#allocation4 + $0x188] sm:$0xff]
    %v184 = vld [vmem:[#allocation4 + $0x190] sm:$0xff]
    %v185 = vld [vmem:[#allocation4 + $0x198] sm:$0xff]
    %v186 = vld [vmem:[#allocation4 + $0x1a0] sm:$0xff]
    %v187 = vld [vmem:[#allocation4 + $0x1a8] sm:$0xff]
    %v188 = vld [vmem:[#allocation4 + $0x1b0] sm:$0xff]
    %v189 = vld [vmem:[#allocation4 + $0x1b8] sm:$0xff]
    %v190 = vld [vmem:[#allocation4 + $0x1c0] sm:$0xff]
    %v191 = vld [vmem:[#allocation4 + $0x1c8] sm:$0xff]
    %v192 = vld [vmem:[#allocation4 + $0x1d0] sm:$0xff]
    %v193 = vld [vmem:[#allocation4 + $0x1d8] sm:$0xff]
    %v194 = vld [vmem:[#allocation4 + $0x1e0] sm:$0xff]
    %v195 = vld [vmem:[#allocation4 + $0x1e8] sm:$0xff]
    %v196 = vld [vmem:[#allocation4 + $0x1f0] sm:$0xff]
    %v197 = vld [vmem:[#allocation4 + $0x1f8] sm:$0xff]
    %v198 = vld [vmem:[#allocation4 + $0x200] sm:$0xff]
    %v199 = vld [vmem:[#allocation4 + $0x208] sm:$0xff]
    %v200 = vld [vmem:[#allocation4 + $0x210] sm:$0xff]
    %v201 = vld [vmem:[#allocation4 + $0x218] sm:$0xff]
    %v202 = vld [vmem:[#allocation4 + $0x220] sm:$0xff]
    %v203 = vld [vmem:[#allocation4 + $0x228] sm:$0xff]
    %v204 = vld [vmem:[#allocation4 + $0x230] sm:$0xff]
    %v205 = vld [vmem:[#allocation4 + $0x238] sm:$0xff]
    %v206 = vld [vmem:[#allocation4 + $0x240] sm:$0xff]
    %v207 = vld [vmem:[#allocation4 + $0x248] sm:$0xff]
    %v208 = vld [vmem:[#allocation4 + $0x250] sm:$0xff]
    %v209 = vld [vmem:[#allocation4 + $0x258] sm:$0xff]
    %v210 = vld [vmem:[#allocation4 + $0x260] sm:$0xff]
    %v211 = vld [vmem:[#allocation4 + $0x268] sm:$0xff]
    %v212 = vld [vmem:[#allocation4 + $0x270] sm:$0xff]
    %v213 = vld [vmem:[#allocation4 + $0x278] sm:$0xff]
    %v214 = vld [vmem:[#allocation4 + $0x280] sm:$0xff]
    %v215 = vld [vmem:[#allocation4 + $0x288] sm:$0xff]
    %v216 = vld [vmem:[#allocation4 + $0x290] sm:$0xff]
    %v217 = vld [vmem:[#allocation4 + $0x298] sm:$0xff]
    %v218 = vld [vmem:[#allocation4 + $0x2a0] sm:$0xff]
    %v219 = vld [vmem:[#allocation4 + $0x2a8] sm:$0xff]
    %v220 = vld [vmem:[#allocation4 + $0x2b0] sm:$0xff]
    %v221 = vld [vmem:[#allocation4 + $0x2b8] sm:$0xff]
    %v222 = vld [vmem:[#allocation4 + $0x2c0] sm:$0xff]
    %v223 = vld [vmem:[#allocation4 + $0x2c8] sm:$0xff]
    %v224 = vld [vmem:[#allocation4 + $0x2d0] sm:$0xff]
    %v225 = vld [vmem:[#allocation4 + $0x2d8] sm:$0xff]
    %v226 = vld [vmem:[#allocation4 + $0x2e0] sm:$0xff]
    %v227 = vld [vmem:[#allocation4 + $0x2e8] sm:$0xff]
    %v228 = vld [vmem:[#allocation4 + $0x2f0] sm:$0xff]
    %v229 = vld [vmem:[#allocation4 + $0x2f8] sm:$0xff]
    %v230 = vld [vmem:[#allocation4 + $0x300] sm:$0xff]
    %v231 = vld [vmem:[#allocation4 + $0x308] sm:$0xff]
    %v232 = vld [vmem:[#allocation4 + $0x310] sm:$0xff]
    %v233 = vld [vmem:[#allocation4 + $0x318] sm:$0xff]
    %v234 = vld [vmem:[#allocation4 + $0x320] sm:$0xff]
    %v235 = vld [vmem:[#allocation4 + $0x328] sm:$0xff]
    %v236 = vld [vmem:[#allocation4 + $0x330] sm:$0xff]
    %v237 = vld [vmem:[#allocation4 + $0x338] sm:$0xff]
    %v238 = vld [vmem:[#allocation4 + $0x340] sm:$0xff]
    %v239 = vld [vmem:[#allocation4 + $0x348] sm:$0xff]
    %v240 = vld [vmem:[#allocation4 + $0x350] sm:$0xff]
    %v241 = vld [vmem:[#allocation4 + $0x358] sm:$0xff]
    %v242 = vld [vmem:[#allocation4 + $0x360] sm:$0xff]
    %v243 = vld [vmem:[#allocation4 + $0x368] sm:$0xff]
    %v244 = vld [vmem:[#allocation4 + $0x370] sm:$0xff]
    %v245 = vld [vmem:[#allocation4 + $0x378] sm:$0xff]
    %v246 = vld [vmem:[#allocation4 + $0x380] sm:$0xff]
    %v247 = vld [vmem:[#allocation4 + $0x388] sm:$0xff]
    %v248 = vld [vmem:[#allocation4 + $0x390] sm:$0xff]
    %v249 = vld [vmem:[#allocation4 + $0x398] sm:$0xff]
    %v250 = vld [vmem:[#allocation4 + $0x3a0] sm:$0xff]
    %v251 = vld [vmem:[#allocation4 + $0x3a8] sm:$0xff]
    %v252 = vld [vmem:[#allocation4 + $0x3b0] sm:$0xff]
    %v253 = vld [vmem:[#allocation4 + $0x3b8] sm:$0xff]
    %v254 = vld [vmem:[#allocation4 + $0x3c0] sm:$0xff]
    %v255 = vld [vmem:[#allocation4 + $0x3c8] sm:$0xff]
    %v256 = vld [vmem:[#allocation4 + $0x3d0] sm:$0xff]
    %v257 = vld [vmem:[#allocation4 + $0x3d8] sm:$0xff]
    %v258 = vld [vmem:[#allocation4 + $0x3e0] sm:$0xff]
    %v259 = vld [vmem:[#allocation4 + $0x3e8] sm:$0xff]
    %v260 = vld [vmem:[#allocation4 + $0x3f0] sm:$0xff]
    %v261 = vld [vmem:[#allocation4 + $0x3f8] sm:$0xff]
    %v262 = vld [vmem:[%s2] sm:$0xf]
    %v264 = vlaneseq
    %v265 = vshrl.u32 %v264, 7
    %v266 = vsub.s32 0, %v265
    %v267 = vrot.slane %v262, %v266
    %v268 = vlaneseq
    %v269 = vshrl.u32 %v268, 7
    %v270 = vsub.s32 1, %v269
    %v271 = vrot.slane %v262, %v270
    %v272 = vlaneseq
    %v273 = vshrl.u32 %v272, 7
    %v274 = vsub.s32 2, %v273
    %v275 = vrot.slane %v262, %v274
    %v276 = vlaneseq
    %v277 = vshrl.u32 %v276, 7
    %v278 = vsub.s32 3, %v277
    %v279 = vrot.slane %v262, %v278
    %284 = vmatprep.subr.mxu0 %v135
    %285 = vmatpush1.msra.mxu0 %v134
    %286 = vmatprep.subr.mxu0 %v139
    %287 = vmatpush1.msra.mxu0 %v138
    %288 = vmatprep.subr.mxu0 %v143
    %289 = vmatpush1.msra.mxu0 %v142
    %290 = vmatprep.subr.mxu0 %v147
    %291 = vmatpush1.msra.mxu0 %v146
    %292 = vmatprep.subr.mxu0 %v151
    %293 = vmatpush1.msra.mxu0 %v150
    %294 = vmatprep.subr.mxu0 %v155
    %295 = vmatpush1.msra.mxu0 %v154
    %296 = vmatprep.subr.mxu0 %v159
    %297 = vmatpush1.msra.mxu0 %v158
    %298 = vmatprep.subr.mxu0 %v163
    %299 = vmatpush1.msra.mxu0 %v162
    %300 = vmatprep.subr.mxu0 %v167
    %301 = vmatpush1.msra.mxu0 %v166
    %302 = vmatprep.subr.mxu0 %v171
    %303 = vmatpush1.msra.mxu0 %v170
    %304 = vmatprep.subr.mxu0 %v175
    %305 = vmatpush1.msra.mxu0 %v174
    %306 = vmatprep.subr.mxu0 %v179
    %307 = vmatpush1.msra.mxu0 %v178
    %308 = vmatprep.subr.mxu0 %v183
    %309 = vmatpush1.msra.mxu0 %v182
    %310 = vmatprep.subr.mxu0 %v187
    %311 = vmatpush1.msra.mxu0 %v186
    %312 = vmatprep.subr.mxu0 %v191
    %313 = vmatpush1.msra.mxu0 %v190
    %314 = vmatprep.subr.mxu0 %v195
    %315 = vmatpush1.msra.mxu0 %v194
    %316 = vmatprep.subr.mxu0 %v199
    %317 = vmatpush1.msra.mxu0 %v198
    %318 = vmatprep.subr.mxu0 %v203
    %319 = vmatpush1.msra.mxu0 %v202
    %320 = vmatprep.subr.mxu0 %v207
    %321 = vmatpush1.msra.mxu0 %v206
    %322 = vmatprep.subr.mxu0 %v211
    %323 = vmatpush1.msra.mxu0 %v210
    %324 = vmatprep.subr.mxu0 %v215
    %325 = vmatpush1.msra.mxu0 %v214
    %326 = vmatprep.subr.mxu0 %v219
    %327 = vmatpush1.msra.mxu0 %v218
    %328 = vmatprep.subr.mxu0 %v223
    %329 = vmatpush1.msra.mxu0 %v222
    %330 = vmatprep.subr.mxu0 %v227
    %331 = vmatpush1.msra.mxu0 %v226
    %332 = vmatprep.subr.mxu0 %v231
    %333 = vmatpush1.msra.mxu0 %v230
    %334 = vmatprep.subr.mxu0 %v235
    %335 = vmatpush1.msra.mxu0 %v234
    %336 = vmatprep.subr.mxu0 %v239
    %337 = vmatpush1.msra.mxu0 %v238
    %338 = vmatprep.subr.mxu0 %v243
    %339 = vmatpush1.msra.mxu0 %v242
    %340 = vmatprep.subr.mxu0 %v247
    %341 = vmatpush1.msra.mxu0 %v246
    %342 = vmatprep.subr.mxu0 %v251
    %343 = vmatpush1.msra.mxu0 %v250
    %344 = vmatprep.subr.mxu0 %v255
    %345 = vmatpush1.msra.mxu0 %v254
    %346 = vmatprep.subr.mxu0 %v259
    %347 = vmatpush1.msra.mxu0 %v258
    %348 = vmatprep.mubr.f32.mxu0 %v127
    %349 = vmatmul.mubr.f32.gmra.mrb[0].mxu0 %v126
    %v350 = vpop.f32.mrb[0].mxu0
    %v351 = vadd.f32 %v267, %v350
    %v352 = vpop.f32.mrb[0].mxu0
    %v353 = vadd.f32 %v271, %v352
    %354 = vmatprep.mubr.f32.mxu0 %v129
    %355 = vmatmul.mubr.f32.gmra.mrb[0].mxu0 %v128
    %v356 = vpop.f32.mrb[0].mxu0
    %v357 = vadd.f32 %v267, %v356
    %v358 = vpop.f32.mrb[0].mxu0
    %v359 = vadd.f32 %v271, %v358
    %360 = vmatprep.mubr.f32.mxu0 %v131
    %361 = vmatmul.mubr.f32.gmra.mrb[0].mxu0 %v130
    %v362 = vpop.f32.mrb[0].mxu0
    %v363 = vadd.f32 %v267, %v362
    %v364 = vpop.f32.mrb[0].mxu0
    %v365 = vadd.f32 %v271, %v364
    %366 = vmatprep.mubr.f32.mxu0 %v133
    %367 = vmatmul.mubr.f32.gmra.mrb[0].mxu0 %v132
    %v368 = vpop.f32.mrb[0].mxu0
    %v369 = vadd.f32 %v267, %v368
    %v370 = vpop.f32.mrb[0].mxu0
    %v371 = vadd.f32 %v271, %v370
    %372 = vdwg.mxu0
    %373 = vmatprep.subr.mxu0 %v137
    %374 = vmatpush1.msra.mxu0 %v136
    %375 = vmatprep.subr.mxu0 %v141
    %376 = vmatpush1.msra.mxu0 %v140
    %377 = vmatprep.subr.mxu0 %v145
    %378 = vmatpush1.msra.mxu0 %v144
    %379 = vmatprep.subr.mxu0 %v149
    %380 = vmatpush1.msra.mxu0 %v148
    %381 = vmatprep.subr.mxu0 %v153
    %382 = vmatpush1.msra.mxu0 %v152
    %383 = vmatprep.subr.mxu0 %v157
    %384 = vmatpush1.msra.mxu0 %v156
    %385 = vmatprep.subr.mxu0 %v161
    %386 = vmatpush1.msra.mxu0 %v160
    %387 = vmatprep.subr.mxu0 %v165
    %388 = vmatpush1.msra.mxu0 %v164
    %389 = vmatprep.subr.mxu0 %v169
    %390 = vmatpush1.msra.mxu0 %v168
    %391 = vmatprep.subr.mxu0 %v173
    %392 = vmatpush1.msra.mxu0 %v172
    %393 = vmatprep.subr.mxu0 %v177
    %394 = vmatpush1.msra.mxu0 %v176
    %395 = vmatprep.subr.mxu0 %v181
    %396 = vmatpush1.msra.mxu0 %v180
    %397 = vmatprep.subr.mxu0 %v185
    %398 = vmatpush1.msra.mxu0 %v184
    %399 = vmatprep.subr.mxu0 %v189
    %400 = vmatpush1.msra.mxu0 %v188
    %401 = vmatprep.subr.mxu0 %v193
    %402 = vmatpush1.msra.mxu0 %v192
    %403 = vmatprep.subr.mxu0 %v197
    %404 = vmatpush1.msra.mxu0 %v196
    %405 = vmatprep.subr.mxu0 %v201
    %406 = vmatpush1.msra.mxu0 %v200
    %407 = vmatprep.subr.mxu0 %v205
    %408 = vmatpush1.msra.mxu0 %v204
    %409 = vmatprep.subr.mxu0 %v209
    %410 = vmatpush1.msra.mxu0 %v208
    %411 = vmatprep.subr.mxu0 %v213
    %412 = vmatpush1.msra.mxu0 %v212
    %413 = vmatprep.subr.mxu0 %v217
    %414 = vmatpush1.msra.mxu0 %v216
    %415 = vmatprep.subr.mxu0 %v221
    %416 = vmatpush1.msra.mxu0 %v220
    %417 = vmatprep.subr.mxu0 %v225
    %418 = vmatpush1.msra.mxu0 %v224
    %419 = vmatprep.subr.mxu0 %v229
    %420 = vmatpush1.msra.mxu0 %v228
    %421 = vmatprep.subr.mxu0 %v233
    %422 = vmatpush1.msra.mxu0 %v232
    %423 = vmatprep.subr.mxu0 %v237
    %424 = vmatpush1.msra.mxu0 %v236
    %425 = vmatprep.subr.mxu0 %v241
    %426 = vmatpush1.msra.mxu0 %v240
    %427 = vmatprep.subr.mxu0 %v245
    %428 = vmatpush1.msra.mxu0 %v244
    %429 = vmatprep.subr.mxu0 %v249
    %430 = vmatpush1.msra.mxu0 %v248
    %431 = vmatprep.subr.mxu0 %v253
    %432 = vmatpush1.msra.mxu0 %v252
    %433 = vmatprep.subr.mxu0 %v257
    %434 = vmatpush1.msra.mxu0 %v256
    %435 = vmatprep.subr.mxu0 %v261
    %436 = vmatpush1.msra.mxu0 %v260
    %437 = vmatprep.mubr.f32.mxu0 %v127
    %438 = vmatmul.mubr.f32.gmra.mrb[0].mxu0 %v126
    %v439 = vpop.f32.mrb[0].mxu0
    %v440 = vadd.f32 %v275, %v439
    %v441 = vpop.f32.mrb[0].mxu0
    %v442 = vadd.f32 %v279, %v441
    %443 = vmatprep.mubr.f32.mxu0 %v129
    %444 = vmatmul.mubr.f32.gmra.mrb[0].mxu0 %v128
    %v445 = vpop.f32.mrb[0].mxu0
    %v446 = vadd.f32 %v275, %v445
    %v447 = vpop.f32.mrb[0].mxu0
    %v448 = vadd.f32 %v279, %v447
    %449 = vmatprep.mubr.f32.mxu0 %v131
    %450 = vmatmul.mubr.f32.gmra.mrb[0].mxu0 %v130
    %v451 = vpop.f32.mrb[0].mxu0
    %v452 = vadd.f32 %v275, %v451
    %v453 = vpop.f32.mrb[0].mxu0
    %v454 = vadd.f32 %v279, %v453
    %455 = vmatprep.mubr.f32.mxu0 %v133
    %456 = vmatmul.mubr.f32.gmra.mrb[0].mxu0 %v132
    %v457 = vpop.f32.mrb[0].mxu0
    %v458 = vadd.f32 %v275, %v457
    %v459 = vpop.f32.mrb[0].mxu0
    %v460 = vadd.f32 %v279, %v459
    %461 = vdwg.mxu0
    %v462 = vmul.f32 %v351, 0.5
    %v463 = vmul.f32 %v353, 0.5
    %v464 = vmul.f32 %v440, 0.5
    %v465 = vmul.f32 %v442, 0.5
    %v466 = vmul.f32 %v357, 0.5
    %v467 = vmul.f32 %v359, 0.5
    %v468 = vmul.f32 %v446, 0.5
    %v469 = vmul.f32 %v448, 0.5
    %v470 = vmul.f32 %v363, 0.5
    %v471 = vmul.f32 %v365, 0.5
    %v472 = vmul.f32 %v452, 0.5
    %v473 = vmul.f32 %v454, 0.5
    %v474 = vmul.f32 %v369, 0.5
    %v475 = vmul.f32 %v371, 0.5
    %v476 = vmul.f32 %v458, 0.5
    %v477 = vmul.f32 %v460, 0.5
    %v478 = vmul.f32 %v351, 0.70710677
    %v479 = vmul.f32 %v353, 0.70710677
    %v480 = vmul.f32 %v440, 0.70710677
    %v481 = vmul.f32 %v442, 0.70710677
    %v482 = vmul.f32 %v357, 0.70710677
    %v483 = vmul.f32 %v359, 0.70710677
    %v484 = vmul.f32 %v446, 0.70710677
    %v485 = vmul.f32 %v448, 0.70710677
    %v486 = vmul.f32 %v363, 0.70710677
    %v487 = vmul.f32 %v365, 0.70710677
    %v488 = vmul.f32 %v452, 0.70710677
    %v489 = vmul.f32 %v454, 0.70710677
    %v490 = vmul.f32 %v369, 0.70710677
    %v491 = vmul.f32 %v371, 0.70710677
    %v492 = vmul.f32 %v458, 0.70710677
    %v493 = vmul.f32 %v460, 0.70710677
    %vm494 = vcmp.ge.f32.partialorder %v478, 0.0
    %vm495 = vcmp.ge.f32.partialorder %v479, 0.0
    %vm496 = vcmp.ge.f32.partialorder %v480, 0.0
    %vm497 = vcmp.ge.f32.partialorder %v481, 0.0
    %vm498 = vcmp.ge.f32.partialorder %v482, 0.0
    %vm499 = vcmp.ge.f32.partialorder %v483, 0.0
    %vm500 = vcmp.ge.f32.partialorder %v484, 0.0
    %vm501 = vcmp.ge.f32.partialorder %v485, 0.0
    %vm502 = vcmp.ge.f32.partialorder %v486, 0.0
    %vm503 = vcmp.ge.f32.partialorder %v487, 0.0
    %vm504 = vcmp.ge.f32.partialorder %v488, 0.0
    %vm505 = vcmp.ge.f32.partialorder %v489, 0.0
    %vm506 = vcmp.ge.f32.partialorder %v490, 0.0
    %vm507 = vcmp.ge.f32.partialorder %v491, 0.0
    %vm508 = vcmp.ge.f32.partialorder %v492, 0.0
    %vm509 = vcmp.ge.f32.partialorder %v493, 0.0
    %v510 = vsel %vm494, 1.0, -1.0
    %v511 = vsel %vm495, 1.0, -1.0
    %v512 = vsel %vm496, 1.0, -1.0
    %v513 = vsel %vm497, 1.0, -1.0
    %v514 = vsel %vm498, 1.0, -1.0
    %v515 = vsel %vm499, 1.0, -1.0
    %v516 = vsel %vm500, 1.0, -1.0
    %v517 = vsel %vm501, 1.0, -1.0
    %v518 = vsel %vm502, 1.0, -1.0
    %v519 = vsel %vm503, 1.0, -1.0
    %v520 = vsel %vm504, 1.0, -1.0
    %v521 = vsel %vm505, 1.0, -1.0
    %v522 = vsel %vm506, 1.0, -1.0
    %v523 = vsel %vm507, 1.0, -1.0
    %v524 = vsel %vm508, 1.0, -1.0
    %v525 = vsel %vm509, 1.0, -1.0
    %v526 = vand.u32 2147483647, %v478
    %v527 = vand.u32 2147483647, %v479
    %v528 = vand.u32 2147483647, %v480
    %v529 = vand.u32 2147483647, %v481
    %v530 = vand.u32 2147483647, %v482
    %v531 = vand.u32 2147483647, %v483
    %v532 = vand.u32 2147483647, %v484
    %v533 = vand.u32 2147483647, %v485
    %v534 = vand.u32 2147483647, %v486
    %v535 = vand.u32 2147483647, %v487
    %v536 = vand.u32 2147483647, %v488
    %v537 = vand.u32 2147483647, %v489
    %v538 = vand.u32 2147483647, %v490
    %v539 = vand.u32 2147483647, %v491
    %v540 = vand.u32 2147483647, %v492
    %v541 = vand.u32 2147483647, %v493
    %v542 = vmul.f32 %v526, 0.3275911
    %v543 = vmul.f32 %v527, 0.3275911
    %v544 = vmul.f32 %v528, 0.3275911
    %v545 = vmul.f32 %v529, 0.3275911
    %v546 = vmul.f32 %v530, 0.3275911
    %v547 = vmul.f32 %v531, 0.3275911
    %v548 = vmul.f32 %v532, 0.3275911
    %v549 = vmul.f32 %v533, 0.3275911
    %v550 = vmul.f32 %v534, 0.3275911
    %v551 = vmul.f32 %v535, 0.3275911
    %v552 = vmul.f32 %v536, 0.3275911
    %v553 = vmul.f32 %v537, 0.3275911
    %v554 = vmul.f32 %v538, 0.3275911
    %v555 = vmul.f32 %v539, 0.3275911
    %v556 = vmul.f32 %v540, 0.3275911
    %v557 = vmul.f32 %v541, 0.3275911
    %v558 = vadd.f32 %v542, 1.0
    %v559 = vadd.f32 %v543, 1.0
    %v560 = vadd.f32 %v544, 1.0
    %v561 = vadd.f32 %v545, 1.0
    %v562 = vadd.f32 %v546, 1.0
    %v563 = vadd.f32 %v547, 1.0
    %v564 = vadd.f32 %v548, 1.0
    %v565 = vadd.f32 %v549, 1.0
    %v566 = vadd.f32 %v550, 1.0
    %v567 = vadd.f32 %v551, 1.0
    %v568 = vadd.f32 %v552, 1.0
    %v569 = vadd.f32 %v553, 1.0
    %v570 = vadd.f32 %v554, 1.0
    %v571 = vadd.f32 %v555, 1.0
    %v572 = vadd.f32 %v556, 1.0
    %v573 = vadd.f32 %v557, 1.0
    %v574 = vrcp.pop %v558
    %v575 = vmul.f32 1.0, %v574
    %v576 = vrcp.pop %v559
    %v577 = vmul.f32 1.0, %v576
    %v578 = vrcp.pop %v560
    %v579 = vmul.f32 1.0, %v578
    %v580 = vrcp.pop %v561
    %v581 = vmul.f32 1.0, %v580
    %v582 = vrcp.pop %v562
    %v583 = vmul.f32 1.0, %v582
    %v584 = vrcp.pop %v563
    %v585 = vmul.f32 1.0, %v584
    %v586 = vrcp.pop %v564
    %v587 = vmul.f32 1.0, %v586
    %v588 = vrcp.pop %v565
    %v589 = vmul.f32 1.0, %v588
    %v590 = vrcp.pop %v566
    %v591 = vmul.f32 1.0, %v590
    %v592 = vrcp.pop %v567
    %v593 = vmul.f32 1.0, %v592
    %v594 = vrcp.pop %v568
    %v595 = vmul.f32 1.0, %v594
    %v596 = vrcp.pop %v569
    %v597 = vmul.f32 1.0, %v596
    %v598 = vrcp.pop %v570
    %v599 = vmul.f32 1.0, %v598
    %v600 = vrcp.pop %v571
    %v601 = vmul.f32 1.0, %v600
    %v602 = vrcp.pop %v572
    %v603 = vmul.f32 1.0, %v602
    %v604 = vrcp.pop %v573
    %v605 = vmul.f32 1.0, %v604
    %v606 = vmul.f32 %v575, 1.0614054
    %v607 = vmul.f32 %v577, 1.0614054
    %v608 = vmul.f32 %v579, 1.0614054
    %v609 = vmul.f32 %v581, 1.0614054
    %v610 = vmul.f32 %v583, 1.0614054
    %v611 = vmul.f32 %v585, 1.0614054
    %v612 = vmul.f32 %v587, 1.0614054
    %v613 = vmul.f32 %v589, 1.0614054
    %v614 = vmul.f32 %v591, 1.0614054
    %v615 = vmul.f32 %v593, 1.0614054
    %v616 = vmul.f32 %v595, 1.0614054
    %v617 = vmul.f32 %v597, 1.0614054
    %v618 = vmul.f32 %v599, 1.0614054
    %v619 = vmul.f32 %v601, 1.0614054
    %v620 = vmul.f32 %v603, 1.0614054
    %v621 = vmul.f32 %v605, 1.0614054
    %v622 = vadd.f32 %v606, -1.4531521
    %v623 = vadd.f32 %v607, -1.4531521
    %v624 = vadd.f32 %v608, -1.4531521
    %v625 = vadd.f32 %v609, -1.4531521
    %v626 = vadd.f32 %v610, -1.4531521
    %v627 = vadd.f32 %v611, -1.4531521
    %v628 = vadd.f32 %v612, -1.4531521
    %v629 = vadd.f32 %v613, -1.4531521
    %v630 = vadd.f32 %v614, -1.4531521
    %v631 = vadd.f32 %v615, -1.4531521
    %v632 = vadd.f32 %v616, -1.4531521
    %v633 = vadd.f32 %v617, -1.4531521
    %v634 = vadd.f32 %v618, -1.4531521
    %v635 = vadd.f32 %v619, -1.4531521
    %v636 = vadd.f32 %v620, -1.4531521
    %v637 = vadd.f32 %v621, -1.4531521
    %v638 = vmul.f32 %v575, %v622
    %v639 = vmul.f32 %v577, %v623
    %v640 = vmul.f32 %v579, %v624
    %v641 = vmul.f32 %v581, %v625
    %v642 = vmul.f32 %v583, %v626
    %v643 = vmul.f32 %v585, %v627
    %v644 = vmul.f32 %v587, %v628
    %v645 = vmul.f32 %v589, %v629
    %v646 = vmul.f32 %v591, %v630
    %v647 = vmul.f32 %v593, %v631
    %v648 = vmul.f32 %v595, %v632
    %v649 = vmul.f32 %v597, %v633
    %v650 = vmul.f32 %v599, %v634
    %v651 = vmul.f32 %v601, %v635
    %v652 = vmul.f32 %v603, %v636
    %v653 = vmul.f32 %v605, %v637
    %v654 = vadd.f32 %v638, 1.4214138
    %v655 = vadd.f32 %v639, 1.4214138
    %v656 = vadd.f32 %v640, 1.4214138
    %v657 = vadd.f32 %v641, 1.4214138
    %v658 = vadd.f32 %v642, 1.4214138
    %v659 = vadd.f32 %v643, 1.4214138
    %v660 = vadd.f32 %v644, 1.4214138
    %v661 = vadd.f32 %v645, 1.4214138
    %v662 = vadd.f32 %v646, 1.4214138
    %v663 = vadd.f32 %v647, 1.4214138
    %v664 = vadd.f32 %v648, 1.4214138
    %v665 = vadd.f32 %v649, 1.4214138
    %v666 = vadd.f32 %v650, 1.4214138
    %v667 = vadd.f32 %v651, 1.4214138
    %v668 = vadd.f32 %v652, 1.4214138
    %v669 = vadd.f32 %v653, 1.4214138
    %v670 = vmul.f32 %v575, %v654
    %v671 = vmul.f32 %v577, %v655
    %v672 = vmul.f32 %v579, %v656
    %v673 = vmul.f32 %v581, %v657
    %v674 = vmul.f32 %v583, %v658
    %v675 = vmul.f32 %v585, %v659
    %v676 = vmul.f32 %v587, %v660
    %v677 = vmul.f32 %v589, %v661
    %v678 = vmul.f32 %v591, %v662
    %v679 = vmul.f32 %v593, %v663
    %v680 = vmul.f32 %v595, %v664
    %v681 = vmul.f32 %v597, %v665
    %v682 = vmul.f32 %v599, %v666
    %v683 = vmul.f32 %v601, %v667
    %v684 = vmul.f32 %v603, %v668
    %v685 = vmul.f32 %v605, %v669
    %v686 = vadd.f32 %v670, -0.28449672
    %v687 = vadd.f32 %v671, -0.28449672
    %v688 = vadd.f32 %v672, -0.28449672
    %v689 = vadd.f32 %v673, -0.28449672
    %v690 = vadd.f32 %v674, -0.28449672
    %v691 = vadd.f32 %v675, -0.28449672
    %v692 = vadd.f32 %v676, -0.28449672
    %v693 = vadd.f32 %v677, -0.28449672
    %v694 = vadd.f32 %v678, -0.28449672
    %v695 = vadd.f32 %v679, -0.28449672
    %v696 = vadd.f32 %v680, -0.28449672
    %v697 = vadd.f32 %v681, -0.28449672
    %v698 = vadd.f32 %v682, -0.28449672
    %v699 = vadd.f32 %v683, -0.28449672
    %v700 = vadd.f32 %v684, -0.28449672
    %v701 = vadd.f32 %v685, -0.28449672
    %v702 = vmul.f32 %v575, %v686
    %v703 = vmul.f32 %v577, %v687
    %v704 = vmul.f32 %v579, %v688
    %v705 = vmul.f32 %v581, %v689
    %v706 = vmul.f32 %v583, %v690
    %v707 = vmul.f32 %v585, %v691
    %v708 = vmul.f32 %v587, %v692
    %v709 = vmul.f32 %v589, %v693
    %v710 = vmul.f32 %v591, %v694
    %v711 = vmul.f32 %v593, %v695
    %v712 = vmul.f32 %v595, %v696
    %v713 = vmul.f32 %v597, %v697
    %v714 = vmul.f32 %v599, %v698
    %v715 = vmul.f32 %v601, %v699
    %v716 = vmul.f32 %v603, %v700
    %v717 = vmul.f32 %v605, %v701
    %v718 = vadd.f32 %v702, 0.2548296
    %v719 = vadd.f32 %v703, 0.2548296
    %v720 = vadd.f32 %v704, 0.2548296
    %v721 = vadd.f32 %v705, 0.2548296
    %v722 = vadd.f32 %v706, 0.2548296
    %v723 = vadd.f32 %v707, 0.2548296
    %v724 = vadd.f32 %v708, 0.2548296
    %v725 = vadd.f32 %v709, 0.2548296
    %v726 = vadd.f32 %v710, 0.2548296
    %v727 = vadd.f32 %v711, 0.2548296
    %v728 = vadd.f32 %v712, 0.2548296
    %v729 = vadd.f32 %v713, 0.2548296
    %v730 = vadd.f32 %v714, 0.2548296
    %v731 = vadd.f32 %v715, 0.2548296
    %v732 = vadd.f32 %v716, 0.2548296
    %v733 = vadd.f32 %v717, 0.2548296
    %v734 = vmul.f32 %v575, %v718
    %v735 = vmul.f32 %v577, %v719
    %v736 = vmul.f32 %v579, %v720
    %v737 = vmul.f32 %v581, %v721
    %v738 = vmul.f32 %v583, %v722
    %v739 = vmul.f32 %v585, %v723
    %v740 = vmul.f32 %v587, %v724
    %v741 = vmul.f32 %v589, %v725
    %v742 = vmul.f32 %v591, %v726
    %v743 = vmul.f32 %v593, %v727
    %v744 = vmul.f32 %v595, %v728
    %v745 = vmul.f32 %v597, %v729
    %v746 = vmul.f32 %v599, %v730
    %v747 = vmul.f32 %v601, %v731
    %v748 = vmul.f32 %v603, %v732
    %v749 = vmul.f32 %v605, %v733
    %v750 = vsub.f32 0.0, %v526
    %v751 = vsub.f32 0.0, %v527
    %v752 = vsub.f32 0.0, %v528
    %v753 = vsub.f32 0.0, %v529
    %v754 = vsub.f32 0.0, %v530
    %v755 = vsub.f32 0.0, %v531
    %v756 = vsub.f32 0.0, %v532
    %v757 = vsub.f32 0.0, %v533
    %v758 = vsub.f32 0.0, %v534
    %v759 = vsub.f32 0.0, %v535
    %v760 = vsub.f32 0.0, %v536
    %v761 = vsub.f32 0.0, %v537
    %v762 = vsub.f32 0.0, %v538
    %v763 = vsub.f32 0.0, %v539
    %v764 = vsub.f32 0.0, %v540
    %v765 = vsub.f32 0.0, %v541
    %v766 = vmul.f32 %v750, %v526
    %v767 = vmul.f32 %v751, %v527
    %v768 = vmul.f32 %v752, %v528
    %v769 = vmul.f32 %v753, %v529
    %v770 = vmul.f32 %v754, %v530
    %v771 = vmul.f32 %v755, %v531
    %v772 = vmul.f32 %v756, %v532
    %v773 = vmul.f32 %v757, %v533
    %v774 = vmul.f32 %v758, %v534
    %v775 = vmul.f32 %v759, %v535
    %v776 = vmul.f32 %v760, %v536
    %v777 = vmul.f32 %v761, %v537
    %v778 = vmul.f32 %v762, %v538
    %v779 = vmul.f32 %v763, %v539
    %v780 = vmul.f32 %v764, %v540
    %v781 = vmul.f32 %v765, %v541
    %v782 = vmul.f32 %v766, 1.442695
    %v783 = vpow.pop %v782
    %v784 = vmul.f32 %v767, 1.442695
    %v785 = vpow.pop %v784
    %v786 = vmul.f32 %v768, 1.442695
    %v787 = vpow.pop %v786
    %v788 = vmul.f32 %v769, 1.442695
    %v789 = vpow.pop %v788
    %v790 = vmul.f32 %v770, 1.442695
    %v791 = vpow.pop %v790
    %v792 = vmul.f32 %v771, 1.442695
    %v793 = vpow.pop %v792
    %v794 = vmul.f32 %v772, 1.442695
    %v795 = vpow.pop %v794
    %v796 = vmul.f32 %v773, 1.442695
    %v797 = vpow.pop %v796
    %v798 = vmul.f32 %v774, 1.442695
    %v799 = vpow.pop %v798
    %v800 = vmul.f32 %v775, 1.442695
    %v801 = vpow.pop %v800
    %v802 = vmul.f32 %v776, 1.442695
    %v803 = vpow.pop %v802
    %v804 = vmul.f32 %v777, 1.442695
    %v805 = vpow.pop %v804
    %v806 = vmul.f32 %v778, 1.442695
    %v807 = vpow.pop %v806
    %v808 = vmul.f32 %v779, 1.442695
    %v809 = vpow.pop %v808
    %v810 = vmul.f32 %v780, 1.442695
    %v811 = vpow.pop %v810
    %v812 = vmul.f32 %v781, 1.442695
    %v813 = vpow.pop %v812
    %v814 = vmul.f32 %v734, %v783
    %v815 = vmul.f32 %v735, %v785
    %v816 = vmul.f32 %v736, %v787
    %v817 = vmul.f32 %v737, %v789
    %v818 = vmul.f32 %v738, %v791
    %v819 = vmul.f32 %v739, %v793
    %v820 = vmul.f32 %v740, %v795
    %v821 = vmul.f32 %v741, %v797
    %v822 = vmul.f32 %v742, %v799
    %v823 = vmul.f32 %v743, %v801
    %v824 = vmul.f32 %v744, %v803
    %v825 = vmul.f32 %v745, %v805
    %v826 = vmul.f32 %v746, %v807
    %v827 = vmul.f32 %v747, %v809
    %v828 = vmul.f32 %v748, %v811
    %v829 = vmul.f32 %v749, %v813
    %v830 = vsub.f32 1.0, %v814
    %v831 = vsub.f32 1.0, %v815
    %v832 = vsub.f32 1.0, %v816
    %v833 = vsub.f32 1.0, %v817
    %v834 = vsub.f32 1.0, %v818
    %v835 = vsub.f32 1.0, %v819
    %v836 = vsub.f32 1.0, %v820
    %v837 = vsub.f32 1.0, %v821
    %v838 = vsub.f32 1.0, %v822
    %v839 = vsub.f32 1.0, %v823
    %v840 = vsub.f32 1.0, %v824
    %v841 = vsub.f32 1.0, %v825
    %v842 = vsub.f32 1.0, %v826
    %v843 = vsub.f32 1.0, %v827
    %v844 = vsub.f32 1.0, %v828
    %v845 = vsub.f32 1.0, %v829
    %v846 = vmul.f32 %v510, %v830
    %v847 = vmul.f32 %v511, %v831
    %v848 = vmul.f32 %v512, %v832
    %v849 = vmul.f32 %v513, %v833
    %v850 = vmul.f32 %v514, %v834
    %v851 = vmul.f32 %v515, %v835
    %v852 = vmul.f32 %v516, %v836
    %v853 = vmul.f32 %v517, %v837
    %v854 = vmul.f32 %v518, %v838
    %v855 = vmul.f32 %v519, %v839
    %v856 = vmul.f32 %v520, %v840
    %v857 = vmul.f32 %v521, %v841
    %v858 = vmul.f32 %v522, %v842
    %v859 = vmul.f32 %v523, %v843
    %v860 = vmul.f32 %v524, %v844
    %v861 = vmul.f32 %v525, %v845
    %v862 = vadd.f32 %v846, 1.0
    %v863 = vadd.f32 %v847, 1.0
    %v864 = vadd.f32 %v848, 1.0
    %v865 = vadd.f32 %v849, 1.0
    %v866 = vadd.f32 %v850, 1.0
    %v867 = vadd.f32 %v851, 1.0
    %v868 = vadd.f32 %v852, 1.0
    %v869 = vadd.f32 %v853, 1.0
    %v870 = vadd.f32 %v854, 1.0
    %v871 = vadd.f32 %v855, 1.0
    %v872 = vadd.f32 %v856, 1.0
    %v873 = vadd.f32 %v857, 1.0
    %v874 = vadd.f32 %v858, 1.0
    %v875 = vadd.f32 %v859, 1.0
    %v876 = vadd.f32 %v860, 1.0
    %v877 = vadd.f32 %v861, 1.0
    %v878 = vmul.f32 %v462, %v862
    %v879 = vmul.f32 %v463, %v863
    %v880 = vmul.f32 %v464, %v864
    %v881 = vmul.f32 %v465, %v865
    %v882 = vmul.f32 %v466, %v866
    %v883 = vmul.f32 %v467, %v867
    %v884 = vmul.f32 %v468, %v868
    %v885 = vmul.f32 %v469, %v869
    %v886 = vmul.f32 %v470, %v870
    %v887 = vmul.f32 %v471, %v871
    %v888 = vmul.f32 %v472, %v872
    %v889 = vmul.f32 %v473, %v873
    %v890 = vmul.f32 %v474, %v874
    %v891 = vmul.f32 %v475, %v875
    %v892 = vmul.f32 %v476, %v876
    %v893 = vmul.f32 %v477, %v877
    %v894 = vld [vmem:[#allocation6] sm:$0xff]
    %v895 = vld [vmem:[#allocation6 + $0x8] sm:$0xff]
    %v896 = vld [vmem:[#allocation6 + $0x10] sm:$0xff]
    %v897 = vld [vmem:[#allocation6 + $0x18] sm:$0xff]
    %v898 = vld [vmem:[#allocation6 + $0x20] sm:$0xff]
    %v899 = vld [vmem:[#allocation6 + $0x28] sm:$0xff]
    %v900 = vld [vmem:[#allocation6 + $0x30] sm:$0xff]
    %v901 = vld [vmem:[#allocation6 + $0x38] sm:$0xff]
    %v902 = vld [vmem:[#allocation6 + $0x40] sm:$0xff]
    %v903 = vld [vmem:[#allocation6 + $0x48] sm:$0xff]
    %v904 = vld [vmem:[#allocation6 + $0x50] sm:$0xff]
    %v905 = vld [vmem:[#allocation6 + $0x58] sm:$0xff]
    %v906 = vld [vmem:[#allocation6 + $0x60] sm:$0xff]
    %v907 = vld [vmem:[#allocation6 + $0x68] sm:$0xff]
    %v908 = vld [vmem:[#allocation6 + $0x70] sm:$0xff]
    %v909 = vld [vmem:[#allocation6 + $0x78] sm:$0xff]
    %v910 = vld [vmem:[#allocation6 + $0x80] sm:$0xff]
    %v911 = vld [vmem:[#allocation6 + $0x88] sm:$0xff]
    %v912 = vld [vmem:[#allocation6 + $0x90] sm:$0xff]
    %v913 = vld [vmem:[#allocation6 + $0x98] sm:$0xff]
    %v914 = vld [vmem:[#allocation6 + $0xa0] sm:$0xff]
    %v915 = vld [vmem:[#allocation6 + $0xa8] sm:$0xff]
    %v916 = vld [vmem:[#allocation6 + $0xb0] sm:$0xff]
    %v917 = vld [vmem:[#allocation6 + $0xb8] sm:$0xff]
    %v918 = vld [vmem:[#allocation6 + $0xc0] sm:$0xff]
    %v919 = vld [vmem:[#allocation6 + $0xc8] sm:$0xff]
    %v920 = vld [vmem:[#allocation6 + $0xd0] sm:$0xff]
    %v921 = vld [vmem:[#allocation6 + $0xd8] sm:$0xff]
    %v922 = vld [vmem:[#allocation6 + $0xe0] sm:$0xff]
    %v923 = vld [vmem:[#allocation6 + $0xe8] sm:$0xff]
    %v924 = vld [vmem:[#allocation6 + $0xf0] sm:$0xff]
    %v925 = vld [vmem:[#allocation6 + $0xf8] sm:$0xff]
    %v926 = vld [vmem:[#allocation6 + $0x100] sm:$0xff]
    %v927 = vld [vmem:[#allocation6 + $0x108] sm:$0xff]
    %v928 = vld [vmem:[#allocation6 + $0x110] sm:$0xff]
    %v929 = vld [vmem:[#allocation6 + $0x118] sm:$0xff]
    %v930 = vld [vmem:[#allocation6 + $0x120] sm:$0xff]
    %v931 = vld [vmem:[#allocation6 + $0x128] sm:$0xff]
    %v932 = vld [vmem:[#allocation6 + $0x130] sm:$0xff]
    %v933 = vld [vmem:[#allocation6 + $0x138] sm:$0xff]
    %v934 = vld [vmem:[#allocation6 + $0x140] sm:$0xff]
    %v935 = vld [vmem:[#allocation6 + $0x148] sm:$0xff]
    %v936 = vld [vmem:[#allocation6 + $0x150] sm:$0xff]
    %v937 = vld [vmem:[#allocation6 + $0x158] sm:$0xff]
    %v938 = vld [vmem:[#allocation6 + $0x160] sm:$0xff]
    %v939 = vld [vmem:[#allocation6 + $0x168] sm:$0xff]
    %v940 = vld [vmem:[#allocation6 + $0x170] sm:$0xff]
    %v941 = vld [vmem:[#allocation6 + $0x178] sm:$0xff]
    %v942 = vld [vmem:[#allocation6 + $0x180] sm:$0xff]
    %v943 = vld [vmem:[#allocation6 + $0x188] sm:$0xff]
    %v944 = vld [vmem:[#allocation6 + $0x190] sm:$0xff]
    %v945 = vld [vmem:[#allocation6 + $0x198] sm:$0xff]
    %v946 = vld [vmem:[#allocation6 + $0x1a0] sm:$0xff]
    %v947 = vld [vmem:[#allocation6 + $0x1a8] sm:$0xff]
    %v948 = vld [vmem:[#allocation6 + $0x1b0] sm:$0xff]
    %v949 = vld [vmem:[#allocation6 + $0x1b8] sm:$0xff]
    %v950 = vld [vmem:[#allocation6 + $0x1c0] sm:$0xff]
    %v951 = vld [vmem:[#allocation6 + $0x1c8] sm:$0xff]
    %v952 = vld [vmem:[#allocation6 + $0x1d0] sm:$0xff]
    %v953 = vld [vmem:[#allocation6 + $0x1d8] sm:$0xff]
    %v954 = vld [vmem:[#allocation6 + $0x1e0] sm:$0xff]
    %v955 = vld [vmem:[#allocation6 + $0x1e8] sm:$0xff]
    %v956 = vld [vmem:[#allocation6 + $0x1f0] sm:$0xff]
    %v957 = vld [vmem:[#allocation6 + $0x1f8] sm:$0xff]
    %v958 = vld [vmem:[%s4] sm:$0x1]
    %v960 = vlaneseq
    %v961 = vshrl.u32 %v960, 7
    %v962 = vsub.s32 0, %v961
    %v963 = vrot.slane %v958, %v962
    %965 = vmatprep.subr.mxu0 0.0
    %966 = vmatpush1.msra.mxu0 %v894
    %967 = vmatprep.subr.mxu0 0.0
    %968 = vmatpush1.msra.mxu0 %v895
    %969 = vmatprep.subr.mxu0 0.0
    %970 = vmatpush1.msra.mxu0 %v896
    %971 = vmatprep.subr.mxu0 0.0
    %972 = vmatpush1.msra.mxu0 %v897
    %973 = vmatprep.subr.mxu0 0.0
    %974 = vmatpush1.msra.mxu0 %v898
    %975 = vmatprep.subr.mxu0 0.0
    %976 = vmatpush1.msra.mxu0 %v899
    %977 = vmatprep.subr.mxu0 0.0
    %978 = vmatpush1.msra.mxu0 %v900
    %979 = vmatprep.subr.mxu0 0.0
    %980 = vmatpush1.msra.mxu0 %v901
    %981 = vmatprep.subr.mxu0 0.0
    %982 = vmatpush1.msra.mxu0 %v902
    %983 = vmatprep.subr.mxu0 0.0
    %984 = vmatpush1.msra.mxu0 %v903
    %985 = vmatprep.subr.mxu0 0.0
    %986 = vmatpush1.msra.mxu0 %v904
    %987 = vmatprep.subr.mxu0 0.0
    %988 = vmatpush1.msra.mxu0 %v905
    %989 = vmatprep.subr.mxu0 0.0
    %990 = vmatpush1.msra.mxu0 %v906
    %991 = vmatprep.subr.mxu0 0.0
    %992 = vmatpush1.msra.mxu0 %v907
    %993 = vmatprep.subr.mxu0 0.0
    %994 = vmatpush1.msra.mxu0 %v908
    %995 = vmatprep.subr.mxu0 0.0
    %996 = vmatpush1.msra.mxu0 %v909
    %997 = vmatprep.subr.mxu0 0.0
    %998 = vmatpush1.msra.mxu0 %v910
    %999 = vmatprep.subr.mxu0 0.0
    %1000 = vmatpush1.msra.mxu0 %v911
    %1001 = vmatprep.subr.mxu0 0.0
    %1002 = vmatpush1.msra.mxu0 %v912
    %1003 = vmatprep.subr.mxu0 0.0
    %1004 = vmatpush1.msra.mxu0 %v913
    %1005 = vmatprep.subr.mxu0 0.0
    %1006 = vmatpush1.msra.mxu0 %v914
    %1007 = vmatprep.subr.mxu0 0.0
    %1008 = vmatpush1.msra.mxu0 %v915
    %1009 = vmatprep.subr.mxu0 0.0
    %1010 = vmatpush1.msra.mxu0 %v916
    %1011 = vmatprep.subr.mxu0 0.0
    %1012 = vmatpush1.msra.mxu0 %v917
    %1013 = vmatprep.subr.mxu0 0.0
    %1014 = vmatpush1.msra.mxu0 %v918
    %1015 = vmatprep.subr.mxu0 0.0
    %1016 = vmatpush1.msra.mxu0 %v919
    %1017 = vmatprep.subr.mxu0 0.0
    %1018 = vmatpush1.msra.mxu0 %v920
    %1019 = vmatprep.subr.mxu0 0.0
    %1020 = vmatpush1.msra.mxu0 %v921
    %1021 = vmatprep.subr.mxu0 0.0
    %1022 = vmatpush1.msra.mxu0 %v922
    %1023 = vmatprep.subr.mxu0 0.0
    %1024 = vmatpush1.msra.mxu0 %v923
    %1025 = vmatprep.subr.mxu0 0.0
    %1026 = vmatpush1.msra.mxu0 %v924
    %1027 = vmatprep.subr.mxu0 0.0
    %1028 = vmatpush1.msra.mxu0 %v925
    %1029 = vmatprep.mubr.f32.mxu0 %v879
    %1030 = vmatmul.mubr.f32.gmra.mrb[0].mxu0 %v878
    %v1031 = vpop.f32.mrb[0].mxu0
    %v1032 = vadd.f32 %v963, %v1031
    %v1033 = vpop.f32.mrb[0].mxu0
    %1034 = vmatprep.mubr.f32.mxu0 %v883
    %1035 = vmatmul.mubr.f32.gmra.mrb[0].mxu0 %v882
    %v1036 = vpop.f32.mrb[0].mxu0
    %v1037 = vadd.f32 %v963, %v1036
    %v1038 = vpop.f32.mrb[0].mxu0
    %1039 = vmatprep.mubr.f32.mxu0 %v887
    %1040 = vmatmul.mubr.f32.gmra.mrb[0].mxu0 %v886
    %v1041 = vpop.f32.mrb[0].mxu0
    %v1042 = vadd.f32 %v963, %v1041
    %v1043 = vpop.f32.mrb[0].mxu0
    %1044 = vmatprep.mubr.f32.mxu0 %v891
    %1045 = vmatmul.mubr.f32.gmra.mrb[0].mxu0 %v890
    %v1046 = vpop.f32.mrb[0].mxu0
    %v1047 = vadd.f32 %v963, %v1046
    %v1048 = vpop.f32.mrb[0].mxu0
    %1049 = vdwg.mxu0
    %1050 = vmatprep.subr.mxu0 0.0
    %1051 = vmatpush1.msra.mxu0 %v926
    %1052 = vmatprep.subr.mxu0 0.0
    %1053 = vmatpush1.msra.mxu0 %v927
    %1054 = vmatprep.subr.mxu0 0.0
    %1055 = vmatpush1.msra.mxu0 %v928
    %1056 = vmatprep.subr.mxu0 0.0
    %1057 = vmatpush1.msra.mxu0 %v929
    %1058 = vmatprep.subr.mxu0 0.0
    %1059 = vmatpush1.msra.mxu0 %v930
    %1060 = vmatprep.subr.mxu0 0.0
    %1061 = vmatpush1.msra.mxu0 %v931
    %1062 = vmatprep.subr.mxu0 0.0
    %1063 = vmatpush1.msra.mxu0 %v932
    %1064 = vmatprep.subr.mxu0 0.0
    %1065 = vmatpush1.msra.mxu0 %v933
    %1066 = vmatprep.subr.mxu0 0.0
    %1067 = vmatpush1.msra.mxu0 %v934
    %1068 = vmatprep.subr.mxu0 0.0
    %1069 = vmatpush1.msra.mxu0 %v935
    %1070 = vmatprep.subr.mxu0 0.0
    %1071 = vmatpush1.msra.mxu0 %v936
    %1072 = vmatprep.subr.mxu0 0.0
    %1073 = vmatpush1.msra.mxu0 %v937
    %1074 = vmatprep.subr.mxu0 0.0
    %1075 = vmatpush1.msra.mxu0 %v938
    %1076 = vmatprep.subr.mxu0 0.0
    %1077 = vmatpush1.msra.mxu0 %v939
    %1078 = vmatprep.subr.mxu0 0.0
    %1079 = vmatpush1.msra.mxu0 %v940
    %1080 = vmatprep.subr.mxu0 0.0
    %1081 = vmatpush1.msra.mxu0 %v941
    %1082 = vmatprep.subr.mxu0 0.0
    %1083 = vmatpush1.msra.mxu0 %v942
    %1084 = vmatprep.subr.mxu0 0.0
    %1085 = vmatpush1.msra.mxu0 %v943
    %1086 = vmatprep.subr.mxu0 0.0
    %1087 = vmatpush1.msra.mxu0 %v944
    %1088 = vmatprep.subr.mxu0 0.0
    %1089 = vmatpush1.msra.mxu0 %v945
    %1090 = vmatprep.subr.mxu0 0.0
    %1091 = vmatpush1.msra.mxu0 %v946
    %1092 = vmatprep.subr.mxu0 0.0
    %1093 = vmatpush1.msra.mxu0 %v947
    %1094 = vmatprep.subr.mxu0 0.0
    %1095 = vmatpush1.msra.mxu0 %v948
    %1096 = vmatprep.subr.mxu0 0.0
    %1097 = vmatpush1.msra.mxu0 %v949
    %1098 = vmatprep.subr.mxu0 0.0
    %1099 = vmatpush1.msra.mxu0 %v950
    %1100 = vmatprep.subr.mxu0 0.0
    %1101 = vmatpush1.msra.mxu0 %v951
    %1102 = vmatprep.subr.mxu0 0.0
    %1103 = vmatpush1.msra.mxu0 %v952
    %1104 = vmatprep.subr.mxu0 0.0
    %1105 = vmatpush1.msra.mxu0 %v953
    %1106 = vmatprep.subr.mxu0 0.0
    %1107 = vmatpush1.msra.mxu0 %v954
    %1108 = vmatprep.subr.mxu0 0.0
    %1109 = vmatpush1.msra.mxu0 %v955
    %1110 = vmatprep.subr.mxu0 0.0
    %1111 = vmatpush1.msra.mxu0 %v956
    %1112 = vmatprep.subr.mxu0 0.0
    %1113 = vmatpush1.msra.mxu0 %v957
    %1114 = vmatprep.mubr.f32.mxu0 %v881
    %1115 = vmatmul.mubr.f32.gmra.mrb[0].mxu0 %v880
    %v1116 = vpop.f32.mrb[0].mxu0
    %v1117 = vadd.f32 %v1032, %v1116
    %v1118 = vpop.f32.mrb[0].mxu0
    %1119 = vmatprep.mubr.f32.mxu0 %v885
    %1120 = vmatmul.mubr.f32.gmra.mrb[0].mxu0 %v884
    %v1121 = vpop.f32.mrb[0].mxu0
    %v1122 = vadd.f32 %v1037, %v1121
    %v1123 = vpop.f32.mrb[0].mxu0
    %1124 = vmatprep.mubr.f32.mxu0 %v889
    %1125 = vmatmul.mubr.f32.gmra.mrb[0].mxu0 %v888
    %v1126 = vpop.f32.mrb[0].mxu0
    %v1127 = vadd.f32 %v1042, %v1126
    %v1128 = vpop.f32.mrb[0].mxu0
    %1129 = vmatprep.mubr.f32.mxu0 %v893
    %1130 = vmatmul.mubr.f32.gmra.mrb[0].mxu0 %v892
    %v1131 = vpop.f32.mrb[0].mxu0
    %v1132 = vadd.f32 %v1047, %v1131
    %v1133 = vpop.f32.mrb[0].mxu0
    %1134 = vdwg.mxu0
    %vm1135 = vcmask 80896
    %1136 = vst.msk [vmem:[%s5] sm:$0xff] %vm1135, %v1117
    %1137 = vst.msk [vmem:[%s5 + $0x8] sm:$0xff] %vm1135, %v1122
    %1138 = vst.msk [vmem:[%s5 + $0x10] sm:$0xff] %vm1135, %v1127
    %1139 = vst.msk [vmem:[%s5 + $0x18] sm:$0xff] %vm1135, %v1132
    // Predicated region
    $region34: #{multitask_head_fused.1} parent=1 // pred_check
      _
    $region35: #{multitask_head_fused.1} parent=1 // pred_check_branch
      %1141 = sbr.rel (0) target = $region37
    $region36: #{multitask_head_fused.1} parent=1 // pred_region
      _
    $region37: #{multitask_head_fused.1} parent=1 // pred_fallthru
      _
    // Predicated region
    $region38: #{multitask_head_fused.1} parent=1 // pred_check
      _
    $region39: #{multitask_head_fused.1} parent=1 // pred_check_branch
      %1143 = sbr.rel (0) target = $region41
    $region40: #{multitask_head_fused.1} parent=1 // pred_region
      _
    $region41: #{multitask_head_fused.1} parent=1 // pred_fallthru
      _
    %1144 = vsyncpa [#allocation3], 1
    %1145 = vsyncpa [#allocation5], 1

</llo_original>
